<compile_context>
chip_gen: v6e
topology: v6e:2x2x1
jax: 0.10.0
libtpu: 0.0.40
codegen_flags: <defaults>
</compile_context>

<pallas_src>
import math
import jax
import jax.numpy as jnp
from jax.experimental import pallas as pl
from jax.experimental.pallas import tpu as pltpu


# ---------------------------------------------------------------------------
# Fused Pallas kernel: per grid step = block_b batch elements, all heads
# ---------------------------------------------------------------------------

def _make_fused_mha_kernel(num_heads, dkp, dv):
    def kernel(q_ref, k_ref, v_ref, wq_ref, wk_ref, wv_ref, o_ref):
        # Block shapes:
        #   q_ref (Bt, Lq, qs), k_ref (Bt, Lk, ks), v_ref (Bt, Lk, vs)
        #   wq_ref (qs, H*dkp), wk_ref (ks, H*dkp), wv_ref (vs, nv)
        #   o_ref (Bt, Lq, nv)
        Bt, Lq, qs = q_ref.shape
        _, Lk, ks = k_ref.shape
        vs = v_ref.shape[2]
        nv = wv_ref.shape[1]

        # --- Fused projections: one big bf16 MXU matmul per projection -------------
        # (Bt, L) merged into the sublane/M dim; all heads live in the lane/N dim.
        Qf = q_ref[...].reshape(Bt * Lq, qs).astype(jnp.bfloat16)
        Kf = k_ref[...].reshape(Bt * Lk, ks).astype(jnp.bfloat16)
        Vf = v_ref[...].reshape(Bt * Lk, vs).astype(jnp.bfloat16)

        Qp = jnp.dot(Qf, wq_ref[...], preferred_element_type=jnp.float32)  # (Bt*Lq, H*dkp)
        Kp = jnp.dot(Kf, wk_ref[...], preferred_element_type=jnp.float32)  # (Bt*Lk, H*dkp)
        Vp = jnp.dot(Vf, wv_ref[...], preferred_element_type=jnp.float32)  # (Bt*Lk, nv)

        Qp = Qp.astype(jnp.bfloat16).reshape(Bt, Lq, num_heads * dkp)
        Kp = Kp.astype(jnp.bfloat16).reshape(Bt, Lk, num_heads * dkp)
        Vp = Vp.astype(jnp.bfloat16).reshape(Bt, Lk, nv)

        # --- Attention per head (H is small -> unrolled at trace time) -------------
        for h in range(num_heads):
            # 128-lane-aligned slices (head slots padded in the wrapper).
            qh = Qp[:, :, h * dkp:(h + 1) * dkp]            # (Bt, Lq, dkp)
            kh = Kp[:, :, h * dkp:(h + 1) * dkp]            # (Bt, Lk, dkp)

            # 1/sqrt(d_k) already folded into Wq. Contract the last dims directly
            # (no explicit K transpose).
            s = jnp.einsum('bqd,bkd->bqk', qh, kh,
                           preferred_element_type=jnp.float32)          # (Bt, Lq, Lk)

            # Numerically-stable softmax; normalization via EUP approx reciprocal.
            m = jnp.max(s, axis=-1, keepdims=True)
            p = jnp.exp(s - m)
            p = p * pl.reciprocal(jnp.sum(p, axis=-1, keepdims=True), approx=True)

            # TODO(synk): dropout is a no-op here (module in eval mode); the masked
            # (valid_lens) softmax path is not part of this forward signature.
            vh = Vp[:, :, h * dv:(h + 1) * dv]                           # (Bt, Lk, dv)
            oh = jnp.einsum('bqk,bkd->bqd', p.astype(jnp.bfloat16), vh,
                            preferred_element_type=jnp.float32)          # (Bt, Lq, dv)

            # Direct store into this head's lane slot of the output slab
            # (transpose_output folded in; no concat, head vregs freed per head).
            o_ref[:, :, h * dv:(h + 1) * dv] = oh.astype(o_ref.dtype)

    return kernel


def _pick_block_b(B, L):
    """Batch elements per grid step.

    Grow block_b*L toward the MXU height (256 on v6e/v7x), but keep >= 2 grid steps
    when B >= 2 so both v7x TensorCores get work (no-op on single-TC v5e/v6e).
    """
    max_rows = 256
    cap = B if B < 2 else max(1, B // 2)
    best = 1
    for d in range(1, B + 1):
        if B % d == 0 and d <= cap and d * L <= max(max_rows, L):
            best = d
    return best


# ---------------------------------------------------------------------------
# Wrapper
# ---------------------------------------------------------------------------

def multi_head_attention(queries, keys, values, Wq, Wk, Wv, num_heads):
    """queries: (B, Lq, q_size), keys: (B, Lk, k_size), values: (B, Lk, v_size).

    Wq: (q_size, 10*num_hiddens), Wk: (k_size, 10*num_hiddens), Wv: (v_size, num_hiddens),
    all stored as (in_features, out_features), bias-free.
    Returns (B, Lq, num_hiddens) in float32.
    """
    B, Lq, qs = queries.shape
    _, Lk, ks = keys.shape
    _, _, vs = values.shape
    nqk = Wq.shape[1]            # 10 * num_hiddens
    nv = Wv.shape[1]             # num_hiddens
    dk = nqk // num_heads
    dv = nv // num_heads

    # Pad each head's q/k column slot to a 128-lane boundary so per-head slices of the
    # fused projection are vreg-aligned. Exact: padded lanes are zero in both q and k.
    dkp = ((dk + 127) // 128) * 128
    inv_sqrt_dk = 1.0 / math.sqrt(dk)

    def pad_heads(W, d, dp):
        if d == dp:
            return W
        Wh = W.reshape(W.shape[0], num_heads, d)
        Wh = jnp.pad(Wh, ((0, 0), (0, 0), (0, dp - d)))
        return Wh.reshape(W.shape[0], num_heads * dp)

    # One-off weight prep: fold the 1/sqrt(dk) score scale into Wq and cast to bf16 so
    # every in-kernel matmul uses the MXU's native bf16 path (f32 accumulation).
    Wq_p = (pad_heads(Wq, dk, dkp) * inv_sqrt_dk).astype(jnp.bfloat16)   # (qs, H*dkp)
    Wk_p = pad_heads(Wk, dk, dkp).astype(jnp.bfloat16)                   # (ks, H*dkp)
    Wv_p = Wv.astype(jnp.bfloat16)                                       # (vs, nv)

    block_b = _pick_block_b(B, Lq)
    grid = (B // block_b,)

    kernel = _make_fused_mha_kernel(num_heads, dkp, dv)

    return pl.pallas_call(
        kernel,
        out_shape=jax.ShapeDtypeStruct((B, Lq, nv), jnp.float32),
        grid_spec=pltpu.PrefetchScalarGridSpec(
            num_scalar_prefetch=0,
            grid=grid,
            in_specs=[
                pl.BlockSpec((block_b, Lq, qs), lambda b: (b, 0, 0)),
                pl.BlockSpec((block_b, Lk, ks), lambda b: (b, 0, 0)),
                pl.BlockSpec((block_b, Lk, vs), lambda b: (b, 0, 0)),
                # Constant index_map -> weights stay resident in VMEM across all steps.
                # TODO(synk): pipeline_mode=pl.Buffered(1) would halve the weight VMEM
                # footprint (relevant for v7x's 64 MiB VMEM); unnecessary at these sizes.
                pl.BlockSpec((qs, Wq_p.shape[1]), lambda b: (0, 0)),
                pl.BlockSpec((ks, Wk_p.shape[1]), lambda b: (0, 0)),
                pl.BlockSpec((vs, nv), lambda b: (0, 0)),
            ],
            out_specs=pl.BlockSpec((block_b, Lq, nv), lambda b: (b, 0, 0)),
        ),
        compiler_params=pltpu.CompilerParams(
            dimension_semantics=("parallel",)),
    )(queries, keys, values, Wq_p, Wk_p, Wv_p)


# ---------------------------------------------------------------------------
# Pure-JAX reference for a sanity check (exact f32)
# ---------------------------------------------------------------------------

def _transpose_qkv(X, num_heads):
    B, L, H = X.shape
    X = X.reshape(B, L, num_heads, H // num_heads)
    X = jnp.transpose(X, (0, 2, 1, 3))
    return X.reshape(B * num_heads, L, H // num_heads)


def _transpose_output(X, num_heads):
    BH, L, d = X.shape
    X = X.reshape(BH // num_heads, num_heads, L, d)
    X = jnp.transpose(X, (0, 2, 1, 3))
    return X.reshape(X.shape[0], L, num_heads * d)


def _reference(queries, keys, values, Wq, Wk, Wv, num_heads):
    q = _transpose_qkv(queries @ Wq, num_heads)
    k = _transpose_qkv(keys @ Wk, num_heads)
    v = _transpose_qkv(values @ Wv, num_heads)
    d = q.shape[-1]
    scores = jnp.einsum("bqd,bkd->bqk", q, k) / math.sqrt(d)
    w = jax.nn.softmax(scores, axis=-1)
    out = jnp.einsum("bqk,bkd->bqd", w, v)
    return _transpose_output(out, num_heads)


if __name__ == "__main__":
    # Module hyperparameters (small, consistent with the __init__ signature)
    key_size = 16
    query_size = 16
    value_size = 16
    num_hiddens = 32
    num_heads = 4
    B, Lq, Lk = 2, 8, 8

    root = jax.random.PRNGKey(0)
    kq, kk, kv, kwq, kwk, kwv = jax.random.split(root, 6)

    queries = jax.random.normal(kq, (B, Lq, query_size), dtype=jnp.float32)
    keys = jax.random.normal(kk, (B, Lk, key_size), dtype=jnp.float32)
    values = jax.random.normal(kv, (B, Lk, value_size), dtype=jnp.float32)

    # Deterministic parameter init (Linear weights stored as (in, out), bias=False)
    Wq = jax.random.normal(kwq, (query_size, num_hiddens * 10), dtype=jnp.float32) * 0.05
    Wk = jax.random.normal(kwk, (key_size, num_hiddens * 10), dtype=jnp.float32) * 0.05
    Wv = jax.random.normal(kwv, (value_size, num_hiddens), dtype=jnp.float32) * 0.05

    out = multi_head_attention(queries, keys, values, Wq, Wk, Wv, num_heads)
    out = jax.block_until_ready(out)

    ref = _reference(queries, keys, values, Wq, Wk, Wv, num_heads)
    assert out.shape == (B, Lq, num_hiddens), out.shape
    # Tolerance loosened vs f32: MXU operands are bf16 (f32 accumulation) and the
    # softmax normalization uses the hardware approx reciprocal (EUP).
    assert jnp.allclose(out, ref, atol=3e-2, rtol=3e-2), "mismatch vs reference"

    print("KERNEL_OK")
</pallas_src>

<mosaic_0001>
module attributes {stable_mosaic.version = 11 : i64} {
  func.func @kernel(%arg0: i32, %arg1: memref<1x8x16xf32, #tpu.memory_space<vmem>>, %arg2: memref<1x8x16xf32, #tpu.memory_space<vmem>>, %arg3: memref<1x8x16xf32, #tpu.memory_space<vmem>>, %arg4: memref<16x512xbf16, #tpu.memory_space<vmem>>, %arg5: memref<16x512xbf16, #tpu.memory_space<vmem>>, %arg6: memref<16x32xbf16, #tpu.memory_space<vmem>>, %arg7: memref<1x8x32xf32, #tpu.memory_space<vmem>>) attributes {dimension_semantics = [#tpu.dimension_semantics<parallel>], iteration_bounds = array<i64: 2>, scalar_prefetch = 0 : i64, scratch_operands = 0 : i64, tpu.core_type = #tpu.core_type<tc>, window_params = [{transform_indices = @transform_0, window_bounds = array<i64: 1, 8, 16>}, {transform_indices = @transform_1, window_bounds = array<i64: 1, 8, 16>}, {transform_indices = @transform_2, window_bounds = array<i64: 1, 8, 16>}, {pipeline_mode = #tpu.pipeline_mode<synchronous>, transform_indices = @transform_3, window_bounds = array<i64: 16, 512>}, {pipeline_mode = #tpu.pipeline_mode<synchronous>, transform_indices = @transform_4, window_bounds = array<i64: 16, 512>}, {pipeline_mode = #tpu.pipeline_mode<synchronous>, transform_indices = @transform_5, window_bounds = array<i64: 16, 32>}, {transform_indices = @transform_6, window_bounds = array<i64: 1, 8, 32>}]} {
    %c0 = arith.constant 0 : index
    %c0_0 = arith.constant 0 : index
    %c0_1 = arith.constant 0 : index
    %0 = vector.load %arg1[%c0, %c0_0, %c0_1] : memref<1x8x16xf32, #tpu.memory_space<vmem>>, vector<1x8x16xf32>
    %1 = vector.shape_cast %0 : vector<1x8x16xf32> to vector<8x16xf32>
    %2 = arith.truncf %1 : vector<8x16xf32> to vector<8x16xbf16>
    %c0_2 = arith.constant 0 : index
    %c0_3 = arith.constant 0 : index
    %c0_4 = arith.constant 0 : index
    %3 = vector.load %arg2[%c0_2, %c0_3, %c0_4] : memref<1x8x16xf32, #tpu.memory_space<vmem>>, vector<1x8x16xf32>
    %4 = vector.shape_cast %3 : vector<1x8x16xf32> to vector<8x16xf32>
    %5 = arith.truncf %4 : vector<8x16xf32> to vector<8x16xbf16>
    %c0_5 = arith.constant 0 : index
    %c0_6 = arith.constant 0 : index
    %c0_7 = arith.constant 0 : index
    %6 = vector.load %arg3[%c0_5, %c0_6, %c0_7] : memref<1x8x16xf32, #tpu.memory_space<vmem>>, vector<1x8x16xf32>
    %7 = vector.shape_cast %6 : vector<1x8x16xf32> to vector<8x16xf32>
    %8 = arith.truncf %7 : vector<8x16xf32> to vector<8x16xbf16>
    %c0_8 = arith.constant 0 : index
    %c0_9 = arith.constant 0 : index
    %9 = vector.load %arg4[%c0_8, %c0_9] : memref<16x512xbf16, #tpu.memory_space<vmem>>, vector<16x512xbf16>
    %cst = arith.constant dense<0.000000e+00> : vector<8x512xf32>
    %10 = tpu.matmul %2, %9, %cst {dimension_numbers = #tpu.dot_dimension_numbers<[1], [0], [0], [1], [0, 0, 1, 1], [], []>} : vector<8x16xbf16>, vector<16x512xbf16>, vector<8x512xf32> -> vector<8x512xf32>
    %c0_10 = arith.constant 0 : index
    %c0_11 = arith.constant 0 : index
    %11 = vector.load %arg5[%c0_10, %c0_11] : memref<16x512xbf16, #tpu.memory_space<vmem>>, vector<16x512xbf16>
    %cst_12 = arith.constant dense<0.000000e+00> : vector<8x512xf32>
    %12 = tpu.matmul %5, %11, %cst_12 {dimension_numbers = #tpu.dot_dimension_numbers<[1], [0], [0], [1], [0, 0, 1, 1], [], []>} : vector<8x16xbf16>, vector<16x512xbf16>, vector<8x512xf32> -> vector<8x512xf32>
    %c0_13 = arith.constant 0 : index
    %c0_14 = arith.constant 0 : index
    %13 = vector.load %arg6[%c0_13, %c0_14] : memref<16x32xbf16, #tpu.memory_space<vmem>>, vector<16x32xbf16>
    %cst_15 = arith.constant dense<0.000000e+00> : vector<8x32xf32>
    %14 = tpu.matmul %8, %13, %cst_15 {dimension_numbers = #tpu.dot_dimension_numbers<[1], [0], [0], [1], [0, 0, 1, 1], [], []>} : vector<8x16xbf16>, vector<16x32xbf16>, vector<8x32xf32> -> vector<8x32xf32>
    %15 = arith.truncf %10 : vector<8x512xf32> to vector<8x512xbf16>
    %16 = vector.shape_cast %15 : vector<8x512xbf16> to vector<1x8x512xbf16>
    %17 = arith.truncf %12 : vector<8x512xf32> to vector<8x512xbf16>
    %18 = vector.shape_cast %17 : vector<8x512xbf16> to vector<1x8x512xbf16>
    %19 = arith.truncf %14 : vector<8x32xf32> to vector<8x32xbf16>
    %20 = vector.shape_cast %19 : vector<8x32xbf16> to vector<1x8x32xbf16>
    %21 = vector.extract_strided_slice %16 {offsets = [0, 0, 0], sizes = [1, 8, 128], strides = [1, 1, 1]} : vector<1x8x512xbf16> to vector<1x8x128xbf16>
    %22 = vector.extract_strided_slice %18 {offsets = [0, 0, 0], sizes = [1, 8, 128], strides = [1, 1, 1]} : vector<1x8x512xbf16> to vector<1x8x128xbf16>
    "tpu.trace_start"() <{level = 10 : i32, message = "bqd,bkd->bqk"}> : () -> ()
    %cst_16 = arith.constant dense<0.000000e+00> : vector<1x8x8xf32>
    %23 = tpu.matmul %21, %22, %cst_16 {dimension_numbers = #tpu.dot_dimension_numbers<[2], [2], [1], [1], [0, 0, 0, 1, 1, 1], [0], [0]>} : vector<1x8x128xbf16>, vector<1x8x128xbf16>, vector<1x8x8xf32> -> vector<1x8x8xf32>
    "tpu.trace_stop"() : () -> ()
    %cst_17 = arith.constant dense<0xFF800000> : vector<1x8xf32>
    %24 = vector.multi_reduction <maximumf>, %23, %cst_17 [2] : vector<1x8x8xf32> to vector<1x8xf32>
    %25 = vector.shape_cast %24 : vector<1x8xf32> to vector<1x8x1xf32>
    %26 = vector.broadcast %25 : vector<1x8x1xf32> to vector<1x8x8xf32>
    %27 = arith.subf %23, %26 : vector<1x8x8xf32>
    %28 = math.exp %27 : vector<1x8x8xf32>
    %cst_18 = arith.constant dense<0.000000e+00> : vector<1x8xf32>
    %29 = vector.multi_reduction <add>, %28, %cst_18 [2] : vector<1x8x8xf32> to vector<1x8xf32>
    %30 = vector.shape_cast %29 : vector<1x8xf32> to vector<1x8x1xf32>
    %31 = tpu.reciprocal %30 {approx = true} : vector<1x8x1xf32> -> vector<1x8x1xf32>
    %32 = vector.broadcast %31 : vector<1x8x1xf32> to vector<1x8x8xf32>
    %33 = arith.mulf %28, %32 : vector<1x8x8xf32>
    %34 = vector.extract_strided_slice %20 {offsets = [0, 0, 0], sizes = [1, 8, 8], strides = [1, 1, 1]} : vector<1x8x32xbf16> to vector<1x8x8xbf16>
    %35 = arith.truncf %33 : vector<1x8x8xf32> to vector<1x8x8xbf16>
    "tpu.trace_start"() <{level = 10 : i32, message = "bqk,bkd->bqd"}> : () -> ()
    %cst_19 = arith.constant dense<0.000000e+00> : vector<1x8x8xf32>
    %36 = tpu.matmul %35, %34, %cst_19 {dimension_numbers = #tpu.dot_dimension_numbers<[2], [1], [1], [2], [0, 0, 0, 1, 1, 2], [0], [0]>} : vector<1x8x8xbf16>, vector<1x8x8xbf16>, vector<1x8x8xf32> -> vector<1x8x8xf32>
    "tpu.trace_stop"() : () -> ()
    %c0_20 = arith.constant 0 : index
    %c0_21 = arith.constant 0 : index
    %c0_22 = arith.constant 0 : index
    %37 = vector.load %arg7[%c0_20, %c0_21, %c0_22] : memref<1x8x32xf32, #tpu.memory_space<vmem>>, vector<1x8x8xf32>
    tpu.vector_store %arg7[%c0_20, %c0_21, %c0_22], %36 {strides = array<i32>} : memref<1x8x32xf32, #tpu.memory_space<vmem>>, vector<1x8x8xf32>,
    %38 = vector.extract_strided_slice %16 {offsets = [0, 0, 128], sizes = [1, 8, 128], strides = [1, 1, 1]} : vector<1x8x512xbf16> to vector<1x8x128xbf16>
    %39 = vector.extract_strided_slice %18 {offsets = [0, 0, 128], sizes = [1, 8, 128], strides = [1, 1, 1]} : vector<1x8x512xbf16> to vector<1x8x128xbf16>
    "tpu.trace_start"() <{level = 10 : i32, message = "bqd,bkd->bqk"}> : () -> ()
    %cst_23 = arith.constant dense<0.000000e+00> : vector<1x8x8xf32>
    %40 = tpu.matmul %38, %39, %cst_23 {dimension_numbers = #tpu.dot_dimension_numbers<[2], [2], [1], [1], [0, 0, 0, 1, 1, 1], [0], [0]>} : vector<1x8x128xbf16>, vector<1x8x128xbf16>, vector<1x8x8xf32> -> vector<1x8x8xf32>
    "tpu.trace_stop"() : () -> ()
    %cst_24 = arith.constant dense<0xFF800000> : vector<1x8xf32>
    %41 = vector.multi_reduction <maximumf>, %40, %cst_24 [2] : vector<1x8x8xf32> to vector<1x8xf32>
    %42 = vector.shape_cast %41 : vector<1x8xf32> to vector<1x8x1xf32>
    %43 = vector.broadcast %42 : vector<1x8x1xf32> to vector<1x8x8xf32>
    %44 = arith.subf %40, %43 : vector<1x8x8xf32>
    %45 = math.exp %44 : vector<1x8x8xf32>
    %cst_25 = arith.constant dense<0.000000e+00> : vector<1x8xf32>
    %46 = vector.multi_reduction <add>, %45, %cst_25 [2] : vector<1x8x8xf32> to vector<1x8xf32>
    %47 = vector.shape_cast %46 : vector<1x8xf32> to vector<1x8x1xf32>
    %48 = tpu.reciprocal %47 {approx = true} : vector<1x8x1xf32> -> vector<1x8x1xf32>
    %49 = vector.broadcast %48 : vector<1x8x1xf32> to vector<1x8x8xf32>
    %50 = arith.mulf %45, %49 : vector<1x8x8xf32>
    %51 = vector.extract_strided_slice %20 {offsets = [0, 0, 8], sizes = [1, 8, 8], strides = [1, 1, 1]} : vector<1x8x32xbf16> to vector<1x8x8xbf16>
    %52 = arith.truncf %50 : vector<1x8x8xf32> to vector<1x8x8xbf16>
    "tpu.trace_start"() <{level = 10 : i32, message = "bqk,bkd->bqd"}> : () -> ()
    %cst_26 = arith.constant dense<0.000000e+00> : vector<1x8x8xf32>
    %53 = tpu.matmul %52, %51, %cst_26 {dimension_numbers = #tpu.dot_dimension_numbers<[2], [1], [1], [2], [0, 0, 0, 1, 1, 2], [0], [0]>} : vector<1x8x8xbf16>, vector<1x8x8xbf16>, vector<1x8x8xf32> -> vector<1x8x8xf32>
    "tpu.trace_stop"() : () -> ()
    %c0_27 = arith.constant 0 : index
    %c0_28 = arith.constant 0 : index
    %c8 = arith.constant 8 : index
    %54 = vector.load %arg7[%c0_27, %c0_28, %c8] : memref<1x8x32xf32, #tpu.memory_space<vmem>>, vector<1x8x8xf32>
    tpu.vector_store %arg7[%c0_27, %c0_28, %c8], %53 {strides = array<i32>} : memref<1x8x32xf32, #tpu.memory_space<vmem>>, vector<1x8x8xf32>,
    %55 = vector.extract_strided_slice %16 {offsets = [0, 0, 256], sizes = [1, 8, 128], strides = [1, 1, 1]} : vector<1x8x512xbf16> to vector<1x8x128xbf16>
    %56 = vector.extract_strided_slice %18 {offsets = [0, 0, 256], sizes = [1, 8, 128], strides = [1, 1, 1]} : vector<1x8x512xbf16> to vector<1x8x128xbf16>
    "tpu.trace_start"() <{level = 10 : i32, message = "bqd,bkd->bqk"}> : () -> ()
    %cst_29 = arith.constant dense<0.000000e+00> : vector<1x8x8xf32>
    %57 = tpu.matmul %55, %56, %cst_29 {dimension_numbers = #tpu.dot_dimension_numbers<[2], [2], [1], [1], [0, 0, 0, 1, 1, 1], [0], [0]>} : vector<1x8x128xbf16>, vector<1x8x128xbf16>, vector<1x8x8xf32> -> vector<1x8x8xf32>
    "tpu.trace_stop"() : () -> ()
    %cst_30 = arith.constant dense<0xFF800000> : vector<1x8xf32>
    %58 = vector.multi_reduction <maximumf>, %57, %cst_30 [2] : vector<1x8x8xf32> to vector<1x8xf32>
    %59 = vector.shape_cast %58 : vector<1x8xf32> to vector<1x8x1xf32>
    %60 = vector.broadcast %59 : vector<1x8x1xf32> to vector<1x8x8xf32>
    %61 = arith.subf %57, %60 : vector<1x8x8xf32>
    %62 = math.exp %61 : vector<1x8x8xf32>
    %cst_31 = arith.constant dense<0.000000e+00> : vector<1x8xf32>
    %63 = vector.multi_reduction <add>, %62, %cst_31 [2] : vector<1x8x8xf32> to vector<1x8xf32>
    %64 = vector.shape_cast %63 : vector<1x8xf32> to vector<1x8x1xf32>
    %65 = tpu.reciprocal %64 {approx = true} : vector<1x8x1xf32> -> vector<1x8x1xf32>
    %66 = vector.broadcast %65 : vector<1x8x1xf32> to vector<1x8x8xf32>
    %67 = arith.mulf %62, %66 : vector<1x8x8xf32>
    %68 = vector.extract_strided_slice %20 {offsets = [0, 0, 16], sizes = [1, 8, 8], strides = [1, 1, 1]} : vector<1x8x32xbf16> to vector<1x8x8xbf16>
    %69 = arith.truncf %67 : vector<1x8x8xf32> to vector<1x8x8xbf16>
    "tpu.trace_start"() <{level = 10 : i32, message = "bqk,bkd->bqd"}> : () -> ()
    %cst_32 = arith.constant dense<0.000000e+00> : vector<1x8x8xf32>
    %70 = tpu.matmul %69, %68, %cst_32 {dimension_numbers = #tpu.dot_dimension_numbers<[2], [1], [1], [2], [0, 0, 0, 1, 1, 2], [0], [0]>} : vector<1x8x8xbf16>, vector<1x8x8xbf16>, vector<1x8x8xf32> -> vector<1x8x8xf32>
    "tpu.trace_stop"() : () -> ()
    %c0_33 = arith.constant 0 : index
    %c0_34 = arith.constant 0 : index
    %c16 = arith.constant 16 : index
    %71 = vector.load %arg7[%c0_33, %c0_34, %c16] : memref<1x8x32xf32, #tpu.memory_space<vmem>>, vector<1x8x8xf32>
    tpu.vector_store %arg7[%c0_33, %c0_34, %c16], %70 {strides = array<i32>} : memref<1x8x32xf32, #tpu.memory_space<vmem>>, vector<1x8x8xf32>,
    %72 = vector.extract_strided_slice %16 {offsets = [0, 0, 384], sizes = [1, 8, 128], strides = [1, 1, 1]} : vector<1x8x512xbf16> to vector<1x8x128xbf16>
    %73 = vector.extract_strided_slice %18 {offsets = [0, 0, 384], sizes = [1, 8, 128], strides = [1, 1, 1]} : vector<1x8x512xbf16> to vector<1x8x128xbf16>
    "tpu.trace_start"() <{level = 10 : i32, message = "bqd,bkd->bqk"}> : () -> ()
    %cst_35 = arith.constant dense<0.000000e+00> : vector<1x8x8xf32>
    %74 = tpu.matmul %72, %73, %cst_35 {dimension_numbers = #tpu.dot_dimension_numbers<[2], [2], [1], [1], [0, 0, 0, 1, 1, 1], [0], [0]>} : vector<1x8x128xbf16>, vector<1x8x128xbf16>, vector<1x8x8xf32> -> vector<1x8x8xf32>
    "tpu.trace_stop"() : () -> ()
    %cst_36 = arith.constant dense<0xFF800000> : vector<1x8xf32>
    %75 = vector.multi_reduction <maximumf>, %74, %cst_36 [2] : vector<1x8x8xf32> to vector<1x8xf32>
    %76 = vector.shape_cast %75 : vector<1x8xf32> to vector<1x8x1xf32>
    %77 = vector.broadcast %76 : vector<1x8x1xf32> to vector<1x8x8xf32>
    %78 = arith.subf %74, %77 : vector<1x8x8xf32>
    %79 = math.exp %78 : vector<1x8x8xf32>
    %cst_37 = arith.constant dense<0.000000e+00> : vector<1x8xf32>
    %80 = vector.multi_reduction <add>, %79, %cst_37 [2] : vector<1x8x8xf32> to vector<1x8xf32>
    %81 = vector.shape_cast %80 : vector<1x8xf32> to vector<1x8x1xf32>
    %82 = tpu.reciprocal %81 {approx = true} : vector<1x8x1xf32> -> vector<1x8x1xf32>
    %83 = vector.broadcast %82 : vector<1x8x1xf32> to vector<1x8x8xf32>
    %84 = arith.mulf %79, %83 : vector<1x8x8xf32>
    %85 = vector.extract_strided_slice %20 {offsets = [0, 0, 24], sizes = [1, 8, 8], strides = [1, 1, 1]} : vector<1x8x32xbf16> to vector<1x8x8xbf16>
    %86 = arith.truncf %84 : vector<1x8x8xf32> to vector<1x8x8xbf16>
    "tpu.trace_start"() <{level = 10 : i32, message = "bqk,bkd->bqd"}> : () -> ()
    %cst_38 = arith.constant dense<0.000000e+00> : vector<1x8x8xf32>
    %87 = tpu.matmul %86, %85, %cst_38 {dimension_numbers = #tpu.dot_dimension_numbers<[2], [1], [1], [2], [0, 0, 0, 1, 1, 2], [0], [0]>} : vector<1x8x8xbf16>, vector<1x8x8xbf16>, vector<1x8x8xf32> -> vector<1x8x8xf32>
    "tpu.trace_stop"() : () -> ()
    %c0_39 = arith.constant 0 : index
    %c0_40 = arith.constant 0 : index
    %c24 = arith.constant 24 : index
    %88 = vector.load %arg7[%c0_39, %c0_40, %c24] : memref<1x8x32xf32, #tpu.memory_space<vmem>>, vector<1x8x8xf32>
    tpu.vector_store %arg7[%c0_39, %c0_40, %c24], %87 {strides = array<i32>} : memref<1x8x32xf32, #tpu.memory_space<vmem>>, vector<1x8x8xf32>,
    return
  }
  func.func @transform_0(%arg0: i32) -> (i32, i32, i32) {
    %c0_i32 = arith.constant 0 : i32
    %c0_i32_0 = arith.constant 0 : i32
    %c0_i32_1 = arith.constant 0 : i32
    return %arg0, %c0_i32, %c0_i32_0 : i32, i32, i32
  }
  func.func @transform_1(%arg0: i32) -> (i32, i32, i32) {
    %c0_i32 = arith.constant 0 : i32
    %c0_i32_0 = arith.constant 0 : i32
    %c0_i32_1 = arith.constant 0 : i32
    return %arg0, %c0_i32, %c0_i32_0 : i32, i32, i32
  }
  func.func @transform_2(%arg0: i32) -> (i32, i32, i32) {
    %c0_i32 = arith.constant 0 : i32
    %c0_i32_0 = arith.constant 0 : i32
    %c0_i32_1 = arith.constant 0 : i32
    return %arg0, %c0_i32, %c0_i32_0 : i32, i32, i32
  }
  func.func @transform_3(%arg0: i32) -> (i32, i32) {
    %c0_i32 = arith.constant 0 : i32
    %c0_i32_0 = arith.constant 0 : i32
    %c0_i32_1 = arith.constant 0 : i32
    return %c0_i32, %c0_i32_0 : i32, i32
  }
  func.func @transform_4(%arg0: i32) -> (i32, i32) {
    %c0_i32 = arith.constant 0 : i32
    %c0_i32_0 = arith.constant 0 : i32
    %c0_i32_1 = arith.constant 0 : i32
    return %c0_i32, %c0_i32_0 : i32, i32
  }
  func.func @transform_5(%arg0: i32) -> (i32, i32) {
    %c0_i32 = arith.constant 0 : i32
    %c0_i32_0 = arith.constant 0 : i32
    %c0_i32_1 = arith.constant 0 : i32
    return %c0_i32, %c0_i32_0 : i32, i32
  }
  func.func @transform_6(%arg0: i32) -> (i32, i32, i32) {
    %c0_i32 = arith.constant 0 : i32
    %c0_i32_0 = arith.constant 0 : i32
    %c0_i32_1 = arith.constant 0 : i32
    return %arg0, %c0_i32, %c0_i32_0 : i32, i32, i32
  }
}

</mosaic_0001>

<llo_original>
// kernel: tpu_custom_call.1
$region0: #{tpu_custom_call.1}
  #allocation0 [shape = 'u32[]', space=smem, size = 0x4, offset = 0x4, fixed_abs, tag = 'smem constant byte address 0x4 - core index']
  #allocation1 [shape = 'u32[144,128]{1,0:T(1,128)}', space=vmem, size = 0x12000, scoped, tag = 'internal scratch']
  %s0 = inlined_call_operand.hbm [shape: f32[2,8,16], index: 0, kind: input, shape index: {}]
  %s1 = inlined_call_operand.hbm [shape: f32[2,8,16], index: 1, kind: input, shape index: {}]
  %s2 = inlined_call_operand.hbm [shape: f32[2,8,16], index: 2, kind: input, shape index: {}]
  %s3 = inlined_call_operand.hbm [shape: bf16[16,512], index: 3, kind: input, shape index: {}]
  %s4 = inlined_call_operand.hbm [shape: bf16[16,512], index: 4, kind: input, shape index: {}]
  %s5 = inlined_call_operand.vmem [shape: bf16[16,32], index: 5, kind: input, shape index: {}]
  %s6 = inlined_call_operand.hbm [shape: f32[2,8,32], index: 6, kind: output, shape index: {}]
  %s7 = sld [smem:[#allocation0]]
  $region77: #{tpu_custom_call.1} parent=0
    _
  %s9 = ssub.s32 1, %s7
  %s10 = scalar_select 0, %s9, %s7
  $region1: #{tpu_custom_call.1} parent=0
    #allocation2 [shape = 'u8[8192]{0}', space=vmem, size = 0x2000, scoped, tag = 'input window, operand 0']
    #allocation3 [shape = 's32[2]{0}', space=sflag, size = 0x8, scoped, tag = 'scoped memory for tpu_custom_call.1']
    #allocation4 [shape = 's32[2]{0}', space=sflag, size = 0x8, scoped, tag = 'scoped memory for tpu_custom_call.1']
    #allocation5 [shape = 'u8[8192]{0}', space=vmem, size = 0x2000, scoped, tag = 'input window, operand 1']
    #allocation6 [shape = 's32[2]{0}', space=sflag, size = 0x8, scoped, tag = 'scoped memory for tpu_custom_call.1']
    #allocation7 [shape = 'u8[8192]{0}', space=vmem, size = 0x2000, scoped, tag = 'input window, operand 2']
    #allocation8 [shape = 'u8[16384]{0}', space=vmem, size = 0x4000, scoped, tag = 'input window, operand 3, single buffered']
    #allocation9 [shape = 's32[1]{0}', space=sflag, size = 0x4, scoped, tag = 'scoped memory for tpu_custom_call.1']
    #allocation10 [shape = 'u8[16384]{0}', space=vmem, size = 0x4000, scoped, tag = 'input window, operand 4, single buffered']
    #allocation11 [shape = 'u8[8192]{0}', space=vmem, size = 0x2000, scoped, tag = 'output window, operand 0']
    %11 = vsyncpa [#allocation3], 0
    %s12 = scalar_lea.sflag [#allocation3], 1
    %13 = vsyncpa %s12, 0
    %14 = vsyncpa [#allocation6], 0
    %s15 = scalar_lea.sflag [#allocation6], 1
    %16 = vsyncpa %s15, 0
    %17 = vsyncpa [#allocation9], 0
    %18 = vsyncpa [#allocation4], 0
    %s19 = scalar_lea.sflag [#allocation4], 1
    %20 = vsyncpa %s19, 0
    loop: start=0, step=1, limit=4
    $region2: #{tpu_custom_call.1} parent=1 // loop_pre_header
      _
    $region3: #{tpu_custom_call.1} parent=1 // loop_header
      %s22 = sphi 0, %s26
      %p23 = scmp.ge.s32.totalorder %s22, 4
      %s32 = sphi 0, %s34
      %s35 = sphi 0, %s32
      %s36 = sphi 0, %s35
      %s52 = sphi 0, %s36
      %s58 = sphi 0, %s60
      %s61 = sphi 0, %s58
      %s62 = sphi 0, %s61
      %s78 = sphi 0, %s62
      %s84 = sphi 0, %s86
      %s87 = sphi 0, %s84
      %s88 = sphi 0, %s87
      %s104 = sphi 0, %s88
      %s108 = sphi 0, %s108
      %s110 = sphi 0, %s108
      %s111 = sphi 0, %s110
      %s125 = sphi 0, %s111
      %s129 = sphi 0, %s129
      %s131 = sphi 0, %s129
      %s132 = sphi 0, %s131
      %s146 = sphi 0, %s132
      %s150 = sphi 0, %s150
      %s152 = sphi 0, %s150
      %s153 = sphi 0, %s152
      %s167 = sphi 0, %s153
      %s173 = sphi 0, %s175
      %s176 = sphi 0, %s173
      %s177 = sphi 0, %s176
      %s193 = sphi 0, %s177
    $region4: #{tpu_custom_call.1} parent=1 // loop_header_branch
      %25 = sbr.rel (%p23) target = $region8
    $region5: #{tpu_custom_call.1} parent=1 // loop_body
      %s27 = ssub.s32 %s22, 1
      %s28 = ssub.s32 %s22, 2
      %s29 = sadd.s32 %s22, 1
      %s30 = ssub.s32 %s22, %s29
      %p31 = scmp.eq.s32.totalorder %s30, 0
      %s33 = sadd.s32 %s32, 1
      %s34 = scalar_select %p31, %s32, %s33
      %p37 = pneg %p31
      %p38 = scmp.eq.s32.totalorder %s22, 1
      %p39 = por %p37, %p38
      %p40 = scmp.ne.s32.totalorder %s32, %s35
      %p41 = scmp.eq.s32.totalorder %s22, 0
      %p42 = por %p40, %p41
      %p43 = scmp.ne.s32.totalorder %s32, %s35
      %p44 = scmp.eq.s32.totalorder %s27, 1
      %p45 = por %p43, %p44
      %p46 = scmp.ne.s32.totalorder %s35, %s36
      %p47 = scmp.eq.s32.totalorder %s27, 0
      %p48 = por %p46, %p47
      %p49 = scmp.ne.s32.totalorder %s35, %s36
      %p50 = scmp.eq.s32.totalorder %s28, 1
      %p51 = por %p49, %p50
      %p53 = scmp.ne.s32.totalorder %s36, %s52
      %p54 = scmp.eq.s32.totalorder %s28, 0
      %p55 = por %p53, %p54
      %s56 = ssub.s32 %s22, %s29
      %p57 = scmp.eq.s32.totalorder %s56, 0
      %s59 = sadd.s32 %s58, 1
      %s60 = scalar_select %p57, %s58, %s59
      %p63 = pneg %p57
      %p64 = scmp.eq.s32.totalorder %s22, 1
      %p65 = por %p63, %p64
      %p66 = scmp.ne.s32.totalorder %s58, %s61
      %p67 = scmp.eq.s32.totalorder %s22, 0
      %p68 = por %p66, %p67
      %p69 = scmp.ne.s32.totalorder %s58, %s61
      %p70 = scmp.eq.s32.totalorder %s27, 1
      %p71 = por %p69, %p70
      %p72 = scmp.ne.s32.totalorder %s61, %s62
      %p73 = scmp.eq.s32.totalorder %s27, 0
      %p74 = por %p72, %p73
      %p75 = scmp.ne.s32.totalorder %s61, %s62
      %p76 = scmp.eq.s32.totalorder %s28, 1
      %p77 = por %p75, %p76
      %p79 = scmp.ne.s32.totalorder %s62, %s78
      %p80 = scmp.eq.s32.totalorder %s28, 0
      %p81 = por %p79, %p80
      %s82 = ssub.s32 %s22, %s29
      %p83 = scmp.eq.s32.totalorder %s82, 0
      %s85 = sadd.s32 %s84, 1
      %s86 = scalar_select %p83, %s84, %s85
      %p89 = pneg %p83
      %p90 = scmp.eq.s32.totalorder %s22, 1
      %p91 = por %p89, %p90
      %p92 = scmp.ne.s32.totalorder %s84, %s87
      %p93 = scmp.eq.s32.totalorder %s22, 0
      %p94 = por %p92, %p93
      %p95 = scmp.ne.s32.totalorder %s84, %s87
      %p96 = scmp.eq.s32.totalorder %s27, 1
      %p97 = por %p95, %p96
      %p98 = scmp.ne.s32.totalorder %s87, %s88
      %p99 = scmp.eq.s32.totalorder %s27, 0
      %p100 = por %p98, %p99
      %p101 = scmp.ne.s32.totalorder %s87, %s88
      %p102 = scmp.eq.s32.totalorder %s28, 1
      %p103 = por %p101, %p102
      %p105 = scmp.ne.s32.totalorder %s88, %s104
      %p106 = scmp.eq.s32.totalorder %s28, 0
      %p107 = por %p105, %p106
      %s109 = sadd.s32 %s108, 1
      %p112 = scmp.eq.s32.totalorder %s22, 1
      %p113 = scmp.ne.s32.totalorder %s108, %s110
      %p114 = scmp.eq.s32.totalorder %s22, 0
      %p115 = por %p113, %p114
      %p116 = scmp.ne.s32.totalorder %s108, %s110
      %p117 = scmp.eq.s32.totalorder %s27, 1
      %p118 = por %p116, %p117
      %p119 = scmp.ne.s32.totalorder %s110, %s111
      %p120 = scmp.eq.s32.totalorder %s27, 0
      %p121 = por %p119, %p120
      %p122 = scmp.ne.s32.totalorder %s110, %s111
      %p123 = scmp.eq.s32.totalorder %s28, 1
      %p124 = por %p122, %p123
      %p126 = scmp.ne.s32.totalorder %s111, %s125
      %p127 = scmp.eq.s32.totalorder %s28, 0
      %p128 = por %p126, %p127
      %s130 = sadd.s32 %s129, 1
      %p133 = scmp.eq.s32.totalorder %s22, 1
      %p134 = scmp.ne.s32.totalorder %s129, %s131
      %p135 = scmp.eq.s32.totalorder %s22, 0
      %p136 = por %p134, %p135
      %p137 = scmp.ne.s32.totalorder %s129, %s131
      %p138 = scmp.eq.s32.totalorder %s27, 1
      %p139 = por %p137, %p138
      %p140 = scmp.ne.s32.totalorder %s131, %s132
      %p141 = scmp.eq.s32.totalorder %s27, 0
      %p142 = por %p140, %p141
      %p143 = scmp.ne.s32.totalorder %s131, %s132
      %p144 = scmp.eq.s32.totalorder %s28, 1
      %p145 = por %p143, %p144
      %p147 = scmp.ne.s32.totalorder %s132, %s146
      %p148 = scmp.eq.s32.totalorder %s28, 0
      %p149 = por %p147, %p148
      %s151 = sadd.s32 %s150, 1
      %p154 = scmp.eq.s32.totalorder %s22, 1
      %p155 = scmp.ne.s32.totalorder %s150, %s152
      %p156 = scmp.eq.s32.totalorder %s22, 0
      %p157 = por %p155, %p156
      %p158 = scmp.ne.s32.totalorder %s150, %s152
      %p159 = scmp.eq.s32.totalorder %s27, 1
      %p160 = por %p158, %p159
      %p161 = scmp.ne.s32.totalorder %s152, %s153
      %p162 = scmp.eq.s32.totalorder %s27, 0
      %p163 = por %p161, %p162
      %p164 = scmp.ne.s32.totalorder %s152, %s153
      %p165 = scmp.eq.s32.totalorder %s28, 1
      %p166 = por %p164, %p165
      %p168 = scmp.ne.s32.totalorder %s153, %s167
      %p169 = scmp.eq.s32.totalorder %s28, 0
      %p170 = por %p168, %p169
      %s171 = ssub.s32 %s22, %s29
      %p172 = scmp.eq.s32.totalorder %s171, 0
      %s174 = sadd.s32 %s173, 1
      %s175 = scalar_select %p172, %s173, %s174
      %p178 = pneg %p172
      %p179 = scmp.eq.s32.totalorder %s22, 1
      %p180 = por %p178, %p179
      %p181 = scmp.ne.s32.totalorder %s173, %s176
      %p182 = scmp.eq.s32.totalorder %s22, 0
      %p183 = por %p181, %p182
      %p184 = scmp.ne.s32.totalorder %s173, %s176
      %p185 = scmp.eq.s32.totalorder %s27, 1
      %p186 = por %p184, %p185
      %p187 = scmp.ne.s32.totalorder %s176, %s177
      %p188 = scmp.eq.s32.totalorder %s27, 0
      %p189 = por %p187, %p188
      %p190 = scmp.ne.s32.totalorder %s176, %s177
      %p191 = scmp.eq.s32.totalorder %s28, 1
      %p192 = por %p190, %p191
      %p194 = scmp.ne.s32.totalorder %s177, %s193
      %p195 = scmp.eq.s32.totalorder %s28, 0
      %p196 = por %p194, %p195
      %p197 = scmp.le.s32.totalorder 1, %s22
      %p198 = scmp.lt.s32.totalorder %s22, 3
      %p199 = pnand %p197, %p198
      %p200 = pneg %p199
      // Predicated region
      $region9: #{tpu_custom_call.1} parent=5 // pred_check
        _
      $region10: #{tpu_custom_call.1} parent=5 // pred_check_branch
        %202 = sbr.rel (%p199) target = $region12
      $region11: #{tpu_custom_call.1} parent=5 // pred_region
        %s203 = ssub.s32 %s22, 1
        // Predicated region
        $region13: #{tpu_custom_call.1} parent=11 // pred_check
          %p204 = pneg %p121
        $region14: #{tpu_custom_call.1} parent=11 // pred_check_branch
          %206 = sbr.rel (%p204) target = $region16
        $region15: #{tpu_custom_call.1} parent=11 // pred_region
          %s208 = ssub.s32 512, 512
          %209 = vsyncadd [#allocation9], %s208
          %s210 = sshll.u32 [#allocation8], 4
          %s211 = int_to_ptr.vmem [resolvable:$true] %s210
          %216 = dma.hbm_to_vmem [thread:$0]  %s3, 512, %s211, [#allocation9], 256, 256, 16
        $region16: #{tpu_custom_call.1} parent=11 // pred_fallthru
          _
        // Predicated region
        $region17: #{tpu_custom_call.1} parent=11 // pred_check
          %p217 = pneg %p142
        $region18: #{tpu_custom_call.1} parent=11 // pred_check_branch
          %219 = sbr.rel (%p217) target = $region20
        $region19: #{tpu_custom_call.1} parent=11 // pred_region
          %s221 = ssub.s32 512, 512
          %222 = vsyncadd [#allocation9], %s221
          %s223 = sshll.u32 [#allocation10], 4
          %s224 = int_to_ptr.vmem [resolvable:$true] %s223
          %229 = dma.hbm_to_vmem [thread:$0]  %s4, 512, %s224, [#allocation9], 256, 256, 16
        $region20: #{tpu_custom_call.1} parent=11 // pred_fallthru
          _
        // Predicated region
        $region21: #{tpu_custom_call.1} parent=11 // pred_check
          %p230 = pneg %p163
        $region22: #{tpu_custom_call.1} parent=11 // pred_check_branch
          %232 = sbr.rel (%p230) target = $region24
        $region23: #{tpu_custom_call.1} parent=11 // pred_region
          _
        $region24: #{tpu_custom_call.1} parent=11 // pred_fallthru
          _
      $region12: #{tpu_custom_call.1} parent=5 // pred_fallthru
        _
      %p233 = scmp.lt.s32.totalorder %s22, 2
      // Predicated region
      $region25: #{tpu_custom_call.1} parent=5 // pred_check
        %p234 = pneg %p233
      $region26: #{tpu_custom_call.1} parent=5 // pred_check_branch
        %236 = sbr.rel (%p234) target = $region28
      $region27: #{tpu_custom_call.1} parent=5 // pred_region
        // Predicated region
        $region29: #{tpu_custom_call.1} parent=27 // pred_check
          %p237 = pneg %p42
        $region30: #{tpu_custom_call.1} parent=27 // pred_check_branch
          %239 = sbr.rel (%p237) target = $region32
        $region31: #{tpu_custom_call.1} parent=27 // pred_region
          %s240 = sand.u32 %s32, 1
          %s241 = scalar_lea.sflag [#allocation3], %s240
          %s242 = sand.u32 %s32, 1
          %s243 = smul.addr %s242, 8
          %s244 = scalar_lea.vmem [#allocation2], %s243
          %s246 = ssub.s32 128, 128
          %247 = vsyncadd %s241, %s246
          %s248 = smul.addr %s22, 128
          %s249 = scalar_lea.hbm %s0, %s248
          %s251 = sshll.u32 %s244, 4
          %s252 = int_to_ptr.vmem [resolvable:$true] %s251
          %254 = dma.hbm_to_vmem [thread:$0]  %s249, 128, %s252, %s241
        $region32: #{tpu_custom_call.1} parent=27 // pred_fallthru
          _
        // Predicated region
        $region33: #{tpu_custom_call.1} parent=27 // pred_check
          %p255 = pneg %p68
        $region34: #{tpu_custom_call.1} parent=27 // pred_check_branch
          %257 = sbr.rel (%p255) target = $region36
        $region35: #{tpu_custom_call.1} parent=27 // pred_region
          %s258 = sand.u32 %s22, 1
          %s259 = scalar_lea.sflag [#allocation6], %s258
          %s260 = sand.u32 %s58, 1
          %s261 = smul.addr %s260, 8
          %s262 = scalar_lea.vmem [#allocation5], %s261
          %s264 = ssub.s32 128, 128
          %265 = vsyncadd %s259, %s264
          %s266 = smul.addr %s22, 128
          %s267 = scalar_lea.hbm %s1, %s266
          %s269 = sshll.u32 %s262, 4
          %s270 = int_to_ptr.vmem [resolvable:$true] %s269
          %272 = dma.hbm_to_vmem [thread:$0]  %s267, 128, %s270, %s259
        $region36: #{tpu_custom_call.1} parent=27 // pred_fallthru
          _
        // Predicated region
        $region37: #{tpu_custom_call.1} parent=27 // pred_check
          %p273 = pneg %p94
        $region38: #{tpu_custom_call.1} parent=27 // pred_check_branch
          %275 = sbr.rel (%p273) target = $region40
        $region39: #{tpu_custom_call.1} parent=27 // pred_region
          %s276 = sand.u32 %s22, 1
          %s277 = scalar_lea.sflag [#allocation6], %s276
          %s278 = sand.u32 %s84, 1
          %s279 = smul.addr %s278, 8
          %s280 = scalar_lea.vmem [#allocation7], %s279
          %s282 = ssub.s32 128, 128
          %283 = vsyncadd %s277, %s282
          %s284 = smul.addr %s22, 128
          %s285 = scalar_lea.hbm %s2, %s284
          %s287 = sshll.u32 %s280, 4
          %s288 = int_to_ptr.vmem [resolvable:$true] %s287
          %290 = dma.hbm_to_vmem [thread:$0]  %s285, 128, %s288, %s277
        $region40: #{tpu_custom_call.1} parent=27 // pred_fallthru
          _
      $region28: #{tpu_custom_call.1} parent=5 // pred_fallthru
        _
      %p291 = scmp.le.s32.totalorder 1, %s22
      %p292 = scmp.lt.s32.totalorder %s22, 3
      %p293 = pnand %p291, %p292
      %p294 = pneg %p293
      // Predicated region
      $region41: #{tpu_custom_call.1} parent=5 // pred_check
        _
      $region42: #{tpu_custom_call.1} parent=5 // pred_check_branch
        %296 = sbr.rel (%p293) target = $region44
      $region43: #{tpu_custom_call.1} parent=5 // pred_region
        %s297 = ssub.s32 %s22, 1
        %s298 = sand.u32 %s35, 1
        %s299 = scalar_lea.sflag [#allocation3], %s298
        %s300 = sand.u32 %s35, 1
        %s301 = smul.addr %s300, 8
        %s302 = scalar_lea.vmem [#allocation2], %s301
        // Predicated region
        $region45: #{tpu_custom_call.1} parent=43 // pred_check
          %p303 = pneg %p48
        $region46: #{tpu_custom_call.1} parent=43 // pred_check_branch
          %305 = sbr.rel (%p303) target = $region48
        $region47: #{tpu_custom_call.1} parent=43 // pred_region
          %306 = dma.done %s299, 128
        $region48: #{tpu_custom_call.1} parent=43 // pred_fallthru
          _
        %s307 = sand.u32 %s27, 1
        %s308 = scalar_lea.sflag [#allocation6], %s307
        %s309 = sand.u32 %s61, 1
        %s310 = smul.addr %s309, 8
        %s311 = scalar_lea.vmem [#allocation5], %s310
        // Predicated region
        $region49: #{tpu_custom_call.1} parent=43 // pred_check
          %p312 = pneg %p74
        $region50: #{tpu_custom_call.1} parent=43 // pred_check_branch
          %314 = sbr.rel (%p312) target = $region52
        $region51: #{tpu_custom_call.1} parent=43 // pred_region
          %315 = dma.done %s308, 128
        $region52: #{tpu_custom_call.1} parent=43 // pred_fallthru
          _
        %s316 = sand.u32 %s27, 1
        %s317 = scalar_lea.sflag [#allocation6], %s316
        %s318 = sand.u32 %s87, 1
        %s319 = smul.addr %s318, 8
        %s320 = scalar_lea.vmem [#allocation7], %s319
        // Predicated region
        $region53: #{tpu_custom_call.1} parent=43 // pred_check
          %p321 = pneg %p100
        $region54: #{tpu_custom_call.1} parent=43 // pred_check_branch
          %323 = sbr.rel (%p321) target = $region56
        $region55: #{tpu_custom_call.1} parent=43 // pred_region
          %324 = dma.done %s317, 128
        $region56: #{tpu_custom_call.1} parent=43 // pred_fallthru
          _
        // Predicated region
        $region57: #{tpu_custom_call.1} parent=43 // pred_check
          %p325 = pneg %p121
        $region58: #{tpu_custom_call.1} parent=43 // pred_check_branch
          %327 = sbr.rel (%p325) target = $region60
        $region59: #{tpu_custom_call.1} parent=43 // pred_region
          %328 = dma.done [#allocation9], 512
        $region60: #{tpu_custom_call.1} parent=43 // pred_fallthru
          _
        // Predicated region
        $region61: #{tpu_custom_call.1} parent=43 // pred_check
          %p329 = pneg %p142
        $region62: #{tpu_custom_call.1} parent=43 // pred_check_branch
          %331 = sbr.rel (%p329) target = $region64
        $region63: #{tpu_custom_call.1} parent=43 // pred_region
          %332 = dma.done [#allocation9], 512
        $region64: #{tpu_custom_call.1} parent=43 // pred_fallthru
          _
        %s333 = sand.u32 %s35, 1
        %s334 = scalar_lea.sflag [#allocation3], %s333
        %s335 = sand.u32 %s35, 1
        %s336 = smul.addr %s335, 8
        %s337 = scalar_lea.vmem [#allocation2], %s336
        %p338 = pneg %p48
        %p339 = pneg %p45
        %s340 = sand.u32 %s27, 1
        %s341 = scalar_lea.sflag [#allocation6], %s340
        %s342 = sand.u32 %s61, 1
        %s343 = smul.addr %s342, 8
        %s344 = scalar_lea.vmem [#allocation5], %s343
        %p345 = pneg %p74
        %p346 = pneg %p71
        %s347 = sand.u32 %s27, 1
        %s348 = scalar_lea.sflag [#allocation6], %s347
        %s349 = sand.u32 %s87, 1
        %s350 = smul.addr %s349, 8
        %s351 = scalar_lea.vmem [#allocation7], %s350
        %p352 = pneg %p100
        %p353 = pneg %p97
        %p354 = pneg %p121
        %p355 = pneg %p118
        %p356 = pneg %p142
        %p357 = pneg %p139
        %p358 = pneg %p163
        %p359 = pneg %p160
        %p360 = pneg %p189
        %p361 = pneg %p186
        %s362 = sand.u32 %s176, 1
        %s363 = scalar_lea.sflag [#allocation4], %s362
        %s364 = sand.u32 %s176, 1
        %s365 = smul.addr %s364, 8
        %s366 = scalar_lea.vmem [#allocation11], %s365
        %v368 = vld [vmem:[%s302] sm:$0xff]
        %v369 = vpack.c.bf16 %v368, %v368
        %v370 = vld [vmem:[%s311] sm:$0xff]
        %v371 = vpack.c.bf16 %v370, %v370
        %v372 = vld [vmem:[%s320] sm:$0xff]
        %v373 = vpack.c.bf16 %v372, %v372
        %v374 = vld [vmem:[#allocation8] sm:$0xff]
        %v375 = vld [vmem:[#allocation8 + $0x8] sm:$0xff]
        %v376 = vld [vmem:[#allocation8 + $0x10] sm:$0xff]
        %v377 = vld [vmem:[#allocation8 + $0x18] sm:$0xff]
        %v382 = vunpack.c.l.b16 %v374
        %v383 = vunpack.c.h.b16 %v374
        %v384 = vunpack.c.l.b16 %v375
        %v385 = vunpack.c.h.b16 %v375
        %v386 = vunpack.c.l.b16 %v376
        %v387 = vunpack.c.h.b16 %v376
        %v388 = vunpack.c.l.b16 %v377
        %v389 = vunpack.c.h.b16 %v377
        %v390 = vpack.c.b16 %v386, %v382
        %v391 = vpack.c.b16 %v387, %v383
        %v392 = vpack.c.b16 %v388, %v384
        %v393 = vpack.c.b16 %v389, %v385
        %vm398 = vcmask 130048
        %v400 = vsel %vm398, %v369, 0
        %402 = vmatprep.subr.bf16.mxu0 0
        %403 = vmatpush1.bf16.msra.mxu0 0
        %404 = vmatprep.subr.bf16.mxu0 0
        %405 = vmatpush1.bf16.msra.mxu0 0
        %406 = vmatprep.subr.bf16.mxu0 0
        %407 = vmatpush1.bf16.msra.mxu0 0
        %408 = vmatprep.subr.bf16.mxu0 0
        %409 = vmatpush1.bf16.msra.mxu0 0
        %410 = vmatprep.subr.bf16.mxu0 0
        %411 = vmatpush1.bf16.msra.mxu0 0
        %412 = vmatprep.subr.bf16.mxu0 0
        %413 = vmatpush1.bf16.msra.mxu0 0
        %414 = vmatprep.subr.bf16.mxu0 0
        %415 = vmatpush1.bf16.msra.mxu0 0
        %416 = vmatprep.subr.bf16.mxu0 %v391
        %417 = vmatpush1.bf16.msra.mxu0 %v390
        %418 = vmatprep.subr.bf16.mxu0 0
        %419 = vmatpush2.bf16.msra.mxu0 0
        %420 = vmatprep.subr.bf16.mxu0 0
        %421 = vmatpush2.bf16.msra.mxu0 0
        %422 = vmatprep.subr.bf16.mxu0 0
        %423 = vmatpush2.bf16.msra.mxu0 0
        %424 = vmatprep.subr.bf16.mxu0 0
        %425 = vmatpush2.bf16.msra.mxu0 0
        %426 = vmatprep.subr.bf16.mxu0 0
        %427 = vmatpush2.bf16.msra.mxu0 0
        %428 = vmatprep.subr.bf16.mxu0 0
        %429 = vmatpush2.bf16.msra.mxu0 0
        %430 = vmatprep.subr.bf16.mxu0 0
        %431 = vmatpush2.bf16.msra.mxu0 0
        %432 = vmatprep.subr.bf16.mxu0 0
        %433 = vmatpush2.bf16.msra.mxu0 0
        %434 = vmatprep.mubr.bf16.mxu0 0
        %435 = vmatmul.mubr.bf16.gmra.mxu0 %v400
        %v436 = vpop.f32.mrf.mxu0
        %v437 = vadd.f32 0.0, %v436
        %v438 = vpop.f32.mrf.mxu0
        %v439 = vadd.f32 0.0, %v438
        %v440 = vpop.f32.mrf.mxu0
        %v441 = vpop.f32.mrf.mxu0
        %442 = vdwg.mxu0
        %443 = vmatprep.subr.bf16.mxu0 0
        %444 = vmatpush1.bf16.msra.mxu0 0
        %445 = vmatprep.subr.bf16.mxu0 0
        %446 = vmatpush1.bf16.msra.mxu0 0
        %447 = vmatprep.subr.bf16.mxu0 0
        %448 = vmatpush1.bf16.msra.mxu0 0
        %449 = vmatprep.subr.bf16.mxu0 0
        %450 = vmatpush1.bf16.msra.mxu0 0
        %451 = vmatprep.subr.bf16.mxu0 0
        %452 = vmatpush1.bf16.msra.mxu0 0
        %453 = vmatprep.subr.bf16.mxu0 0
        %454 = vmatpush1.bf16.msra.mxu0 0
        %455 = vmatprep.subr.bf16.mxu0 0
        %456 = vmatpush1.bf16.msra.mxu0 0
        %457 = vmatprep.subr.bf16.mxu0 %v393
        %458 = vmatpush1.bf16.msra.mxu0 %v392
        %459 = vmatprep.subr.bf16.mxu0 0
        %460 = vmatpush2.bf16.msra.mxu0 0
        %461 = vmatprep.subr.bf16.mxu0 0
        %462 = vmatpush2.bf16.msra.mxu0 0
        %463 = vmatprep.subr.bf16.mxu0 0
        %464 = vmatpush2.bf16.msra.mxu0 0
        %465 = vmatprep.subr.bf16.mxu0 0
        %466 = vmatpush2.bf16.msra.mxu0 0
        %467 = vmatprep.subr.bf16.mxu0 0
        %468 = vmatpush2.bf16.msra.mxu0 0
        %469 = vmatprep.subr.bf16.mxu0 0
        %470 = vmatpush2.bf16.msra.mxu0 0
        %471 = vmatprep.subr.bf16.mxu0 0
        %472 = vmatpush2.bf16.msra.mxu0 0
        %473 = vmatprep.subr.bf16.mxu0 0
        %474 = vmatpush2.bf16.msra.mxu0 0
        %475 = vmatprep.mubr.bf16.mxu0 0
        %476 = vmatmul.mubr.bf16.gmra.mxu0 %v400
        %v477 = vpop.f32.mrf.mxu0
        %v478 = vadd.f32 0.0, %v477
        %v479 = vpop.f32.mrf.mxu0
        %v480 = vadd.f32 0.0, %v479
        %v481 = vpop.f32.mrf.mxu0
        %v482 = vpop.f32.mrf.mxu0
        %483 = vdwg.mxu0
        %v484 = vld [vmem:[#allocation10] sm:$0xff]
        %v485 = vld [vmem:[#allocation10 + $0x8] sm:$0xff]
        %v486 = vld [vmem:[#allocation10 + $0x10] sm:$0xff]
        %v487 = vld [vmem:[#allocation10 + $0x18] sm:$0xff]
        %v492 = vunpack.c.l.b16 %v484
        %v493 = vunpack.c.h.b16 %v484
        %v494 = vunpack.c.l.b16 %v485
        %v495 = vunpack.c.h.b16 %v485
        %v496 = vunpack.c.l.b16 %v486
        %v497 = vunpack.c.h.b16 %v486
        %v498 = vunpack.c.l.b16 %v487
        %v499 = vunpack.c.h.b16 %v487
        %v500 = vpack.c.b16 %v496, %v492
        %v501 = vpack.c.b16 %v497, %v493
        %v502 = vpack.c.b16 %v498, %v494
        %v503 = vpack.c.b16 %v499, %v495
        %v509 = vsel %vm398, %v371, 0
        %511 = vmatprep.subr.bf16.mxu0 0
        %512 = vmatpush1.bf16.msra.mxu0 0
        %513 = vmatprep.subr.bf16.mxu0 0
        %514 = vmatpush1.bf16.msra.mxu0 0
        %515 = vmatprep.subr.bf16.mxu0 0
        %516 = vmatpush1.bf16.msra.mxu0 0
        %517 = vmatprep.subr.bf16.mxu0 0
        %518 = vmatpush1.bf16.msra.mxu0 0
        %519 = vmatprep.subr.bf16.mxu0 0
        %520 = vmatpush1.bf16.msra.mxu0 0
        %521 = vmatprep.subr.bf16.mxu0 0
        %522 = vmatpush1.bf16.msra.mxu0 0
        %523 = vmatprep.subr.bf16.mxu0 0
        %524 = vmatpush1.bf16.msra.mxu0 0
        %525 = vmatprep.subr.bf16.mxu0 %v501
        %526 = vmatpush1.bf16.msra.mxu0 %v500
        %527 = vmatprep.subr.bf16.mxu0 0
        %528 = vmatpush2.bf16.msra.mxu0 0
        %529 = vmatprep.subr.bf16.mxu0 0
        %530 = vmatpush2.bf16.msra.mxu0 0
        %531 = vmatprep.subr.bf16.mxu0 0
        %532 = vmatpush2.bf16.msra.mxu0 0
        %533 = vmatprep.subr.bf16.mxu0 0
        %534 = vmatpush2.bf16.msra.mxu0 0
        %535 = vmatprep.subr.bf16.mxu0 0
        %536 = vmatpush2.bf16.msra.mxu0 0
        %537 = vmatprep.subr.bf16.mxu0 0
        %538 = vmatpush2.bf16.msra.mxu0 0
        %539 = vmatprep.subr.bf16.mxu0 0
        %540 = vmatpush2.bf16.msra.mxu0 0
        %541 = vmatprep.subr.bf16.mxu0 0
        %542 = vmatpush2.bf16.msra.mxu0 0
        %543 = vmatprep.mubr.bf16.mxu0 0
        %544 = vmatmul.mubr.bf16.gmra.mxu0 %v509
        %v545 = vpop.f32.mrf.mxu0
        %v546 = vadd.f32 0.0, %v545
        %v547 = vpop.f32.mrf.mxu0
        %v548 = vadd.f32 0.0, %v547
        %v549 = vpop.f32.mrf.mxu0
        %v550 = vpop.f32.mrf.mxu0
        %551 = vdwg.mxu0
        %552 = vmatprep.subr.bf16.mxu0 0
        %553 = vmatpush1.bf16.msra.mxu0 0
        %554 = vmatprep.subr.bf16.mxu0 0
        %555 = vmatpush1.bf16.msra.mxu0 0
        %556 = vmatprep.subr.bf16.mxu0 0
        %557 = vmatpush1.bf16.msra.mxu0 0
        %558 = vmatprep.subr.bf16.mxu0 0
        %559 = vmatpush1.bf16.msra.mxu0 0
        %560 = vmatprep.subr.bf16.mxu0 0
        %561 = vmatpush1.bf16.msra.mxu0 0
        %562 = vmatprep.subr.bf16.mxu0 0
        %563 = vmatpush1.bf16.msra.mxu0 0
        %564 = vmatprep.subr.bf16.mxu0 0
        %565 = vmatpush1.bf16.msra.mxu0 0
        %566 = vmatprep.subr.bf16.mxu0 %v503
        %567 = vmatpush1.bf16.msra.mxu0 %v502
        %568 = vmatprep.subr.bf16.mxu0 0
        %569 = vmatpush2.bf16.msra.mxu0 0
        %570 = vmatprep.subr.bf16.mxu0 0
        %571 = vmatpush2.bf16.msra.mxu0 0
        %572 = vmatprep.subr.bf16.mxu0 0
        %573 = vmatpush2.bf16.msra.mxu0 0
        %574 = vmatprep.subr.bf16.mxu0 0
        %575 = vmatpush2.bf16.msra.mxu0 0
        %576 = vmatprep.subr.bf16.mxu0 0
        %577 = vmatpush2.bf16.msra.mxu0 0
        %578 = vmatprep.subr.bf16.mxu0 0
        %579 = vmatpush2.bf16.msra.mxu0 0
        %580 = vmatprep.subr.bf16.mxu0 0
        %581 = vmatpush2.bf16.msra.mxu0 0
        %582 = vmatprep.subr.bf16.mxu0 0
        %583 = vmatpush2.bf16.msra.mxu0 0
        %584 = vmatprep.mubr.bf16.mxu0 0
        %585 = vmatmul.mubr.bf16.gmra.mxu0 %v509
        %v586 = vpop.f32.mrf.mxu0
        %v587 = vadd.f32 0.0, %v586
        %v588 = vpop.f32.mrf.mxu0
        %v589 = vadd.f32 0.0, %v588
        %v590 = vpop.f32.mrf.mxu0
        %v591 = vpop.f32.mrf.mxu0
        %592 = vdwg.mxu0
        %v593 = vld [vmem:[%s5] sm:$0xf]
        %v594 = vld [vmem:[%s5 + $0x4] sm:$0xf]
        %v597 = vunpack.c.l.b16 %v593
        %v598 = vunpack.c.l.b16 %v594
        %v599 = vpack.c.b16 %v598, %v597
        %v602 = vsel %vm398, %v373, 0
        %604 = vmatprep.subr.bf16.mxu0 0
        %605 = vmatpush1.bf16.msra.mxu0 0
        %606 = vmatprep.subr.bf16.mxu0 0
        %607 = vmatpush1.bf16.msra.mxu0 0
        %608 = vmatprep.subr.bf16.mxu0 0
        %609 = vmatpush1.bf16.msra.mxu0 0
        %610 = vmatprep.subr.bf16.mxu0 0
        %611 = vmatpush1.bf16.msra.mxu0 0
        %612 = vmatprep.subr.bf16.mxu0 0
        %613 = vmatpush1.bf16.msra.mxu0 0
        %614 = vmatprep.subr.bf16.mxu0 0
        %615 = vmatpush1.bf16.msra.mxu0 0
        %616 = vmatprep.subr.bf16.mxu0 0
        %617 = vmatpush1.bf16.msra.mxu0 0
        %618 = vmatprep.subr.bf16.mxu0 0
        %619 = vmatpush1.bf16.msra.mxu0 %v599
        %620 = vmatprep.subr.bf16.mxu0 0
        %621 = vmatpush2.bf16.msra.mxu0 0
        %622 = vmatprep.subr.bf16.mxu0 0
        %623 = vmatpush2.bf16.msra.mxu0 0
        %624 = vmatprep.subr.bf16.mxu0 0
        %625 = vmatpush2.bf16.msra.mxu0 0
        %626 = vmatprep.subr.bf16.mxu0 0
        %627 = vmatpush2.bf16.msra.mxu0 0
        %628 = vmatprep.subr.bf16.mxu0 0
        %629 = vmatpush2.bf16.msra.mxu0 0
        %630 = vmatprep.subr.bf16.mxu0 0
        %631 = vmatpush2.bf16.msra.mxu0 0
        %632 = vmatprep.subr.bf16.mxu0 0
        %633 = vmatpush2.bf16.msra.mxu0 0
        %634 = vmatprep.subr.bf16.mxu0 0
        %635 = vmatpush2.bf16.msra.mxu0 0
        %636 = vmatprep.mubr.bf16.mxu0 0
        %637 = vmatmul.mubr.bf16.gmra.mxu0 %v602
        %v638 = vpop.f32.mrf.mxu0
        %v639 = vadd.f32 0.0, %v638
        %v640 = vpop.f32.mrf.mxu0
        %v641 = vpop.f32.mrf.mxu0
        %v642 = vpop.f32.mrf.mxu0
        %643 = vdwg.mxu0
        %v644 = vpack.c.bf16 %v437, %v437
        %v645 = vpack.c.bf16 %v439, %v439
        %v646 = vpack.c.bf16 %v478, %v478
        %v647 = vpack.c.bf16 %v480, %v480
        %v648 = vpack.c.bf16 %v546, %v546
        %v649 = vpack.c.bf16 %v548, %v548
        %v650 = vpack.c.bf16 %v587, %v587
        %v651 = vpack.c.bf16 %v589, %v589
        %v652 = vpack.c.bf16 %v639, %v639
        %653 = vmatprep.subr.bf16.mxu0 0
        %654 = vmatpush1.bf16.xpose.msra.mxu0 0
        %655 = vmatprep.subr.bf16.mxu0 0
        %656 = vmatpush1.bf16.xpose.msra.mxu0 0
        %657 = vmatprep.subr.bf16.mxu0 0
        %658 = vmatpush1.bf16.xpose.msra.mxu0 0
        %659 = vmatprep.subr.bf16.mxu0 0
        %660 = vmatpush1.bf16.xpose.msra.mxu0 0
        %661 = vmatprep.subr.bf16.mxu0 0
        %662 = vmatpush1.bf16.xpose.msra.mxu0 0
        %663 = vmatprep.subr.bf16.mxu0 0
        %664 = vmatpush1.bf16.xpose.msra.mxu0 0
        %665 = vmatprep.subr.bf16.mxu0 0
        %666 = vmatpush1.bf16.xpose.msra.mxu0 0
        %667 = vmatprep.subr.bf16.mxu0 0
        %668 = vmatpush1.bf16.xpose.msra.mxu0 %v648
        %669 = vmatprep.subr.bf16.mxu0 0
        %670 = vmatpush2.bf16.xpose.msra.mxu0 0
        %671 = vmatprep.subr.bf16.mxu0 0
        %672 = vmatpush2.bf16.xpose.msra.mxu0 0
        %673 = vmatprep.subr.bf16.mxu0 0
        %674 = vmatpush2.bf16.xpose.msra.mxu0 0
        %675 = vmatprep.subr.bf16.mxu0 0
        %676 = vmatpush2.bf16.xpose.msra.mxu0 0
        %677 = vmatprep.subr.bf16.mxu0 0
        %678 = vmatpush2.bf16.xpose.msra.mxu0 0
        %679 = vmatprep.subr.bf16.mxu0 0
        %680 = vmatpush2.bf16.xpose.msra.mxu0 0
        %681 = vmatprep.subr.bf16.mxu0 0
        %682 = vmatpush2.bf16.xpose.msra.mxu0 0
        %683 = vmatprep.subr.bf16.mxu0 0
        %684 = vmatpush2.bf16.xpose.msra.mxu0 0
        %685 = vmatprep.mubr.bf16.mxu0 0
        %686 = vmatmul.mubr.bf16.gmra.mxu0 %v644
        %v687 = vpop.f32.mrf.mxu0
        %v688 = vadd.f32 0.0, %v687
        %v689 = vpop.f32.mrf.mxu0
        %v690 = vpop.f32.mrf.mxu0
        %v691 = vpop.f32.mrf.mxu0
        %692 = vdwg.mxu0
        %vm693 = vcmask 64512
        %v694 = vsel %vm693, %v688, -inf
        %695 = vmax.xlane.f32.xlu0 %v694
        %v696 = vpop.xlane.xlu0 %695
        %v697 = vsub.f32 %v688, %v696
        %v698 = vmul.f32 %v697, 1.442695
        %v699 = vpow.pop %v698
        %v700 = vsel %vm693, %v699, 0.0
        %701 = vadd.xlane.f32.xlu0 %v700
        %v702 = vpop.xlane.xlu0 %701
        %v703 = vrcp.pop %v702
        %v704 = vmul.f32 %v699, %v703
        %v705 = vpack.c.bf16 %v704, %v704
        %v707 = vsel %vm693, %v705, 0
        %vm709 = vcmask 1043456
        %v711 = vsel %vm709, %v652, 0
        %713 = vmatprep.subr.bf16.mxu0 0
        %714 = vmatpush1.bf16.msra.mxu0 0
        %715 = vmatprep.subr.bf16.mxu0 0
        %716 = vmatpush1.bf16.msra.mxu0 0
        %717 = vmatprep.subr.bf16.mxu0 0
        %718 = vmatpush1.bf16.msra.mxu0 0
        %719 = vmatprep.subr.bf16.mxu0 0
        %720 = vmatpush1.bf16.msra.mxu0 0
        %721 = vmatprep.subr.bf16.mxu0 0
        %722 = vmatpush1.bf16.msra.mxu0 0
        %723 = vmatprep.subr.bf16.mxu0 0
        %724 = vmatpush1.bf16.msra.mxu0 0
        %725 = vmatprep.subr.bf16.mxu0 0
        %726 = vmatpush1.bf16.msra.mxu0 0
        %727 = vmatprep.subr.bf16.mxu0 0
        %728 = vmatpush1.bf16.msra.mxu0 %v711
        %729 = vmatprep.subr.bf16.mxu0 0
        %730 = vmatpush2.bf16.msra.mxu0 0
        %731 = vmatprep.subr.bf16.mxu0 0
        %732 = vmatpush2.bf16.msra.mxu0 0
        %733 = vmatprep.subr.bf16.mxu0 0
        %734 = vmatpush2.bf16.msra.mxu0 0
        %735 = vmatprep.subr.bf16.mxu0 0
        %736 = vmatpush2.bf16.msra.mxu0 0
        %737 = vmatprep.subr.bf16.mxu0 0
        %738 = vmatpush2.bf16.msra.mxu0 0
        %739 = vmatprep.subr.bf16.mxu0 0
        %740 = vmatpush2.bf16.msra.mxu0 0
        %741 = vmatprep.subr.bf16.mxu0 0
        %742 = vmatpush2.bf16.msra.mxu0 0
        %743 = vmatprep.subr.bf16.mxu0 0
        %744 = vmatpush2.bf16.msra.mxu0 0
        %745 = vmatprep.mubr.bf16.mxu0 0
        %746 = vmatmul.mubr.bf16.gmra.mxu0 %v707
        %v747 = vpop.f32.mrf.mxu0
        %v748 = vadd.f32 0.0, %v747
        %v749 = vpop.f32.mrf.mxu0
        %v750 = vpop.f32.mrf.mxu0
        %v751 = vpop.f32.mrf.mxu0
        %752 = vdwg.mxu0
        %753 = vst.msk [vmem:[%s366] sm:$0xff] %vm693, %v748
        %754 = vmatprep.subr.bf16.mxu0 0
        %755 = vmatpush1.bf16.xpose.msra.mxu0 0
        %756 = vmatprep.subr.bf16.mxu0 0
        %757 = vmatpush1.bf16.xpose.msra.mxu0 0
        %758 = vmatprep.subr.bf16.mxu0 0
        %759 = vmatpush1.bf16.xpose.msra.mxu0 0
        %760 = vmatprep.subr.bf16.mxu0 0
        %761 = vmatpush1.bf16.xpose.msra.mxu0 0
        %762 = vmatprep.subr.bf16.mxu0 0
        %763 = vmatpush1.bf16.xpose.msra.mxu0 0
        %764 = vmatprep.subr.bf16.mxu0 0
        %765 = vmatpush1.bf16.xpose.msra.mxu0 0
        %766 = vmatprep.subr.bf16.mxu0 0
        %767 = vmatpush1.bf16.xpose.msra.mxu0 0
        %768 = vmatprep.subr.bf16.mxu0 0
        %769 = vmatpush1.bf16.xpose.msra.mxu0 %v649
        %770 = vmatprep.subr.bf16.mxu0 0
        %771 = vmatpush2.bf16.xpose.msra.mxu0 0
        %772 = vmatprep.subr.bf16.mxu0 0
        %773 = vmatpush2.bf16.xpose.msra.mxu0 0
        %774 = vmatprep.subr.bf16.mxu0 0
        %775 = vmatpush2.bf16.xpose.msra.mxu0 0
        %776 = vmatprep.subr.bf16.mxu0 0
        %777 = vmatpush2.bf16.xpose.msra.mxu0 0
        %778 = vmatprep.subr.bf16.mxu0 0
        %779 = vmatpush2.bf16.xpose.msra.mxu0 0
        %780 = vmatprep.subr.bf16.mxu0 0
        %781 = vmatpush2.bf16.xpose.msra.mxu0 0
        %782 = vmatprep.subr.bf16.mxu0 0
        %783 = vmatpush2.bf16.xpose.msra.mxu0 0
        %784 = vmatprep.subr.bf16.mxu0 0
        %785 = vmatpush2.bf16.xpose.msra.mxu0 0
        %786 = vmatprep.mubr.bf16.mxu0 0
        %787 = vmatmul.mubr.bf16.gmra.mxu0 %v645
        %v788 = vpop.f32.mrf.mxu0
        %v789 = vadd.f32 0.0, %v788
        %v790 = vpop.f32.mrf.mxu0
        %v791 = vpop.f32.mrf.mxu0
        %v792 = vpop.f32.mrf.mxu0
        %793 = vdwg.mxu0
        %v794 = vsel %vm693, %v789, -inf
        %795 = vmax.xlane.f32.xlu0 %v794
        %v796 = vpop.xlane.xlu0 %795
        %v797 = vsub.f32 %v789, %v796
        %v798 = vmul.f32 %v797, 1.442695
        %v799 = vpow.pop %v798
        %v800 = vsel %vm693, %v799, 0.0
        %801 = vadd.xlane.f32.xlu0 %v800
        %v802 = vpop.xlane.xlu0 %801
        %v803 = vrcp.pop %v802
        %v804 = vmul.f32 %v799, %v803
        %v805 = vpack.c.bf16 %v804, %v804
        %807 = vrot.lane.b32.xlu0 %v652, 120
        %v808 = vpop.permute.xlu0 %807
        %v810 = vsel %vm693, %v805, 0
        %v813 = vsel %vm709, %v808, 0
        %815 = vmatprep.subr.bf16.mxu0 0
        %816 = vmatpush1.bf16.msra.mxu0 0
        %817 = vmatprep.subr.bf16.mxu0 0
        %818 = vmatpush1.bf16.msra.mxu0 0
        %819 = vmatprep.subr.bf16.mxu0 0
        %820 = vmatpush1.bf16.msra.mxu0 0
        %821 = vmatprep.subr.bf16.mxu0 0
        %822 = vmatpush1.bf16.msra.mxu0 0
        %823 = vmatprep.subr.bf16.mxu0 0
        %824 = vmatpush1.bf16.msra.mxu0 0
        %825 = vmatprep.subr.bf16.mxu0 0
        %826 = vmatpush1.bf16.msra.mxu0 0
        %827 = vmatprep.subr.bf16.mxu0 0
        %828 = vmatpush1.bf16.msra.mxu0 0
        %829 = vmatprep.subr.bf16.mxu0 0
        %830 = vmatpush1.bf16.msra.mxu0 %v813
        %831 = vmatprep.subr.bf16.mxu0 0
        %832 = vmatpush2.bf16.msra.mxu0 0
        %833 = vmatprep.subr.bf16.mxu0 0
        %834 = vmatpush2.bf16.msra.mxu0 0
        %835 = vmatprep.subr.bf16.mxu0 0
        %836 = vmatpush2.bf16.msra.mxu0 0
        %837 = vmatprep.subr.bf16.mxu0 0
        %838 = vmatpush2.bf16.msra.mxu0 0
        %839 = vmatprep.subr.bf16.mxu0 0
        %840 = vmatpush2.bf16.msra.mxu0 0
        %841 = vmatprep.subr.bf16.mxu0 0
        %842 = vmatpush2.bf16.msra.mxu0 0
        %843 = vmatprep.subr.bf16.mxu0 0
        %844 = vmatpush2.bf16.msra.mxu0 0
        %845 = vmatprep.subr.bf16.mxu0 0
        %846 = vmatpush2.bf16.msra.mxu0 0
        %847 = vmatprep.mubr.bf16.mxu0 0
        %848 = vmatmul.mubr.bf16.gmra.mxu0 %v810
        %v849 = vpop.f32.mrf.mxu0
        %v850 = vadd.f32 0.0, %v849
        %v851 = vpop.f32.mrf.mxu0
        %v852 = vpop.f32.mrf.mxu0
        %v853 = vpop.f32.mrf.mxu0
        %854 = vdwg.mxu0
        %856 = vrot.lane.b32.xlu0 %v850, 8
        %v857 = vpop.permute.xlu0 %856
        %vm859 = vcmask 130112
        %860 = vst.msk [vmem:[%s366] sm:$0xff] %vm859, %v857
        %861 = vmatprep.subr.bf16.mxu0 0
        %862 = vmatpush1.bf16.xpose.msra.mxu0 0
        %863 = vmatprep.subr.bf16.mxu0 0
        %864 = vmatpush1.bf16.xpose.msra.mxu0 0
        %865 = vmatprep.subr.bf16.mxu0 0
        %866 = vmatpush1.bf16.xpose.msra.mxu0 0
        %867 = vmatprep.subr.bf16.mxu0 0
        %868 = vmatpush1.bf16.xpose.msra.mxu0 0
        %869 = vmatprep.subr.bf16.mxu0 0
        %870 = vmatpush1.bf16.xpose.msra.mxu0 0
        %871 = vmatprep.subr.bf16.mxu0 0
        %872 = vmatpush1.bf16.xpose.msra.mxu0 0
        %873 = vmatprep.subr.bf16.mxu0 0
        %874 = vmatpush1.bf16.xpose.msra.mxu0 0
        %875 = vmatprep.subr.bf16.mxu0 0
        %876 = vmatpush1.bf16.xpose.msra.mxu0 %v650
        %877 = vmatprep.subr.bf16.mxu0 0
        %878 = vmatpush2.bf16.xpose.msra.mxu0 0
        %879 = vmatprep.subr.bf16.mxu0 0
        %880 = vmatpush2.bf16.xpose.msra.mxu0 0
        %881 = vmatprep.subr.bf16.mxu0 0
        %882 = vmatpush2.bf16.xpose.msra.mxu0 0
        %883 = vmatprep.subr.bf16.mxu0 0
        %884 = vmatpush2.bf16.xpose.msra.mxu0 0
        %885 = vmatprep.subr.bf16.mxu0 0
        %886 = vmatpush2.bf16.xpose.msra.mxu0 0
        %887 = vmatprep.subr.bf16.mxu0 0
        %888 = vmatpush2.bf16.xpose.msra.mxu0 0
        %889 = vmatprep.subr.bf16.mxu0 0
        %890 = vmatpush2.bf16.xpose.msra.mxu0 0
        %891 = vmatprep.subr.bf16.mxu0 0
        %892 = vmatpush2.bf16.xpose.msra.mxu0 0
        %893 = vmatprep.mubr.bf16.mxu0 0
        %894 = vmatmul.mubr.bf16.gmra.mxu0 %v646
        %v895 = vpop.f32.mrf.mxu0
        %v896 = vadd.f32 0.0, %v895
        %v897 = vpop.f32.mrf.mxu0
        %v898 = vpop.f32.mrf.mxu0
        %v899 = vpop.f32.mrf.mxu0
        %900 = vdwg.mxu0
        %v901 = vsel %vm693, %v896, -inf
        %902 = vmax.xlane.f32.xlu0 %v901
        %v903 = vpop.xlane.xlu0 %902
        %v904 = vsub.f32 %v896, %v903
        %v905 = vmul.f32 %v904, 1.442695
        %v906 = vpow.pop %v905
        %v907 = vsel %vm693, %v906, 0.0
        %908 = vadd.xlane.f32.xlu0 %v907
        %v909 = vpop.xlane.xlu0 %908
        %v910 = vrcp.pop %v909
        %v911 = vmul.f32 %v906, %v910
        %v912 = vpack.c.bf16 %v911, %v911
        %913 = vrot.lane.b32.xlu0 %v652, 112
        %v914 = vpop.permute.xlu0 %913
        %v916 = vsel %vm693, %v912, 0
        %v919 = vsel %vm709, %v914, 0
        %921 = vmatprep.subr.bf16.mxu0 0
        %922 = vmatpush1.bf16.msra.mxu0 0
        %923 = vmatprep.subr.bf16.mxu0 0
        %924 = vmatpush1.bf16.msra.mxu0 0
        %925 = vmatprep.subr.bf16.mxu0 0
        %926 = vmatpush1.bf16.msra.mxu0 0
        %927 = vmatprep.subr.bf16.mxu0 0
        %928 = vmatpush1.bf16.msra.mxu0 0
        %929 = vmatprep.subr.bf16.mxu0 0
        %930 = vmatpush1.bf16.msra.mxu0 0
        %931 = vmatprep.subr.bf16.mxu0 0
        %932 = vmatpush1.bf16.msra.mxu0 0
        %933 = vmatprep.subr.bf16.mxu0 0
        %934 = vmatpush1.bf16.msra.mxu0 0
        %935 = vmatprep.subr.bf16.mxu0 0
        %936 = vmatpush1.bf16.msra.mxu0 %v919
        %937 = vmatprep.subr.bf16.mxu0 0
        %938 = vmatpush2.bf16.msra.mxu0 0
        %939 = vmatprep.subr.bf16.mxu0 0
        %940 = vmatpush2.bf16.msra.mxu0 0
        %941 = vmatprep.subr.bf16.mxu0 0
        %942 = vmatpush2.bf16.msra.mxu0 0
        %943 = vmatprep.subr.bf16.mxu0 0
        %944 = vmatpush2.bf16.msra.mxu0 0
        %945 = vmatprep.subr.bf16.mxu0 0
        %946 = vmatpush2.bf16.msra.mxu0 0
        %947 = vmatprep.subr.bf16.mxu0 0
        %948 = vmatpush2.bf16.msra.mxu0 0
        %949 = vmatprep.subr.bf16.mxu0 0
        %950 = vmatpush2.bf16.msra.mxu0 0
        %951 = vmatprep.subr.bf16.mxu0 0
        %952 = vmatpush2.bf16.msra.mxu0 0
        %953 = vmatprep.mubr.bf16.mxu0 0
        %954 = vmatmul.mubr.bf16.gmra.mxu0 %v916
        %v955 = vpop.f32.mrf.mxu0
        %v956 = vadd.f32 0.0, %v955
        %v957 = vpop.f32.mrf.mxu0
        %v958 = vpop.f32.mrf.mxu0
        %v959 = vpop.f32.mrf.mxu0
        %960 = vdwg.mxu0
        %962 = vrot.lane.b32.xlu0 %v956, 16
        %v963 = vpop.permute.xlu0 %962
        %vm965 = vcmask 195712
        %966 = vst.msk [vmem:[%s366] sm:$0xff] %vm965, %v963
        %967 = vmatprep.subr.bf16.mxu0 0
        %968 = vmatpush1.bf16.xpose.msra.mxu0 0
        %969 = vmatprep.subr.bf16.mxu0 0
        %970 = vmatpush1.bf16.xpose.msra.mxu0 0
        %971 = vmatprep.subr.bf16.mxu0 0
        %972 = vmatpush1.bf16.xpose.msra.mxu0 0
        %973 = vmatprep.subr.bf16.mxu0 0
        %974 = vmatpush1.bf16.xpose.msra.mxu0 0
        %975 = vmatprep.subr.bf16.mxu0 0
        %976 = vmatpush1.bf16.xpose.msra.mxu0 0
        %977 = vmatprep.subr.bf16.mxu0 0
        %978 = vmatpush1.bf16.xpose.msra.mxu0 0
        %979 = vmatprep.subr.bf16.mxu0 0
        %980 = vmatpush1.bf16.xpose.msra.mxu0 0
        %981 = vmatprep.subr.bf16.mxu0 0
        %982 = vmatpush1.bf16.xpose.msra.mxu0 %v651
        %983 = vmatprep.subr.bf16.mxu0 0
        %984 = vmatpush2.bf16.xpose.msra.mxu0 0
        %985 = vmatprep.subr.bf16.mxu0 0
        %986 = vmatpush2.bf16.xpose.msra.mxu0 0
        %987 = vmatprep.subr.bf16.mxu0 0
        %988 = vmatpush2.bf16.xpose.msra.mxu0 0
        %989 = vmatprep.subr.bf16.mxu0 0
        %990 = vmatpush2.bf16.xpose.msra.mxu0 0
        %991 = vmatprep.subr.bf16.mxu0 0
        %992 = vmatpush2.bf16.xpose.msra.mxu0 0
        %993 = vmatprep.subr.bf16.mxu0 0
        %994 = vmatpush2.bf16.xpose.msra.mxu0 0
        %995 = vmatprep.subr.bf16.mxu0 0
        %996 = vmatpush2.bf16.xpose.msra.mxu0 0
        %997 = vmatprep.subr.bf16.mxu0 0
        %998 = vmatpush2.bf16.xpose.msra.mxu0 0
        %999 = vmatprep.mubr.bf16.mxu0 0
        %1000 = vmatmul.mubr.bf16.gmra.mxu0 %v647
        %v1001 = vpop.f32.mrf.mxu0
        %v1002 = vadd.f32 0.0, %v1001
        %v1003 = vpop.f32.mrf.mxu0
        %v1004 = vpop.f32.mrf.mxu0
        %v1005 = vpop.f32.mrf.mxu0
        %1006 = vdwg.mxu0
        %v1007 = vsel %vm693, %v1002, -inf
        %1008 = vmax.xlane.f32.xlu0 %v1007
        %v1009 = vpop.xlane.xlu0 %1008
        %v1010 = vsub.f32 %v1002, %v1009
        %v1011 = vmul.f32 %v1010, 1.442695
        %v1012 = vpow.pop %v1011
        %v1013 = vsel %vm693, %v1012, 0.0
        %1014 = vadd.xlane.f32.xlu0 %v1013
        %v1015 = vpop.xlane.xlu0 %1014
        %v1016 = vrcp.pop %v1015
        %v1017 = vmul.f32 %v1012, %v1016
        %v1018 = vpack.c.bf16 %v1017, %v1017
        %1019 = vrot.lane.b32.xlu0 %v652, 104
        %v1020 = vpop.permute.xlu0 %1019
        %v1022 = vsel %vm693, %v1018, 0
        %v1025 = vsel %vm709, %v1020, 0
        %1027 = vmatprep.subr.bf16.mxu0 0
        %1028 = vmatpush1.bf16.msra.mxu0 0
        %1029 = vmatprep.subr.bf16.mxu0 0
        %1030 = vmatpush1.bf16.msra.mxu0 0
        %1031 = vmatprep.subr.bf16.mxu0 0
        %1032 = vmatpush1.bf16.msra.mxu0 0
        %1033 = vmatprep.subr.bf16.mxu0 0
        %1034 = vmatpush1.bf16.msra.mxu0 0
        %1035 = vmatprep.subr.bf16.mxu0 0
        %1036 = vmatpush1.bf16.msra.mxu0 0
        %1037 = vmatprep.subr.bf16.mxu0 0
        %1038 = vmatpush1.bf16.msra.mxu0 0
        %1039 = vmatprep.subr.bf16.mxu0 0
        %1040 = vmatpush1.bf16.msra.mxu0 0
        %1041 = vmatprep.subr.bf16.mxu0 0
        %1042 = vmatpush1.bf16.msra.mxu0 %v1025
        %1043 = vmatprep.subr.bf16.mxu0 0
        %1044 = vmatpush2.bf16.msra.mxu0 0
        %1045 = vmatprep.subr.bf16.mxu0 0
        %1046 = vmatpush2.bf16.msra.mxu0 0
        %1047 = vmatprep.subr.bf16.mxu0 0
        %1048 = vmatpush2.bf16.msra.mxu0 0
        %1049 = vmatprep.subr.bf16.mxu0 0
        %1050 = vmatpush2.bf16.msra.mxu0 0
        %1051 = vmatprep.subr.bf16.mxu0 0
        %1052 = vmatpush2.bf16.msra.mxu0 0
        %1053 = vmatprep.subr.bf16.mxu0 0
        %1054 = vmatpush2.bf16.msra.mxu0 0
        %1055 = vmatprep.subr.bf16.mxu0 0
        %1056 = vmatpush2.bf16.msra.mxu0 0
        %1057 = vmatprep.subr.bf16.mxu0 0
        %1058 = vmatpush2.bf16.msra.mxu0 0
        %1059 = vmatprep.mubr.bf16.mxu0 0
        %1060 = vmatmul.mubr.bf16.gmra.mxu0 %v1022
        %v1061 = vpop.f32.mrf.mxu0
        %v1062 = vadd.f32 0.0, %v1061
        %v1063 = vpop.f32.mrf.mxu0
        %v1064 = vpop.f32.mrf.mxu0
        %v1065 = vpop.f32.mrf.mxu0
        %1066 = vdwg.mxu0
        %1068 = vrot.lane.b32.xlu0 %v1062, 24
        %v1069 = vpop.permute.xlu0 %1068
        %vm1071 = vcmask 261312
        %1072 = vst.msk [vmem:[%s366] sm:$0xff] %vm1071, %v1069
        %s1073 = sand.u32 %s176, 1
        %s1074 = scalar_lea.sflag [#allocation4], %s1073
        %s1075 = sand.u32 %s176, 1
        %s1076 = smul.addr %s1075, 8
        %s1077 = scalar_lea.vmem [#allocation11], %s1076
        // Predicated region
        $region65: #{tpu_custom_call.1} parent=43 // pred_check
          %p1078 = pneg %p186
        $region66: #{tpu_custom_call.1} parent=43 // pred_check_branch
          %1080 = sbr.rel (%p1078) target = $region68
        $region67: #{tpu_custom_call.1} parent=43 // pred_region
          %s1082 = ssub.s32 128, 128
          %1083 = vsyncadd %s1074, %s1082
          %s1084 = smul.addr %s27, 128
          %s1085 = scalar_lea.hbm %s6, %s1084
          %s1087 = sshll.u32 %s1077, 4
          %s1088 = int_to_ptr.vmem [resolvable:$true] %s1087
          %1090 = dma.vmem_to_hbm [thread:$0]  %s1088, 128, %s1085, %s1074
        $region68: #{tpu_custom_call.1} parent=43 // pred_fallthru
          _
      $region44: #{tpu_custom_call.1} parent=5 // pred_fallthru
        _
      %p1091 = scmp.le.s32.totalorder 2, %s22
      // Predicated region
      $region69: #{tpu_custom_call.1} parent=5 // pred_check
        %p1092 = pneg %p1091
      $region70: #{tpu_custom_call.1} parent=5 // pred_check_branch
        %1094 = sbr.rel (%p1092) target = $region72
      $region71: #{tpu_custom_call.1} parent=5 // pred_region
        %s1095 = ssub.s32 %s22, 2
        // Predicated region
        $region73: #{tpu_custom_call.1} parent=71 // pred_check
          %p1096 = pneg %p192
        $region74: #{tpu_custom_call.1} parent=71 // pred_check_branch
          %1098 = sbr.rel (%p1096) target = $region76
        $region75: #{tpu_custom_call.1} parent=71 // pred_region
          %s1099 = sand.u32 %s177, 1
          %s1100 = scalar_lea.sflag [#allocation4], %s1099
          %s1101 = sand.u32 %s177, 1
          %s1102 = smul.addr %s1101, 8
          %s1103 = scalar_lea.vmem [#allocation11], %s1102
          %1104 = dma.done %s1100, 128
        $region76: #{tpu_custom_call.1} parent=71 // pred_fallthru
          _
      $region72: #{tpu_custom_call.1} parent=5 // pred_fallthru
        _
    $region6: #{tpu_custom_call.1} parent=1 // loop_footer
      %s26 = sadd.s32 1, %s22
    $region7: #{tpu_custom_call.1} parent=1 // loop_footer_branch
      %21 = sbr.rel target = $region3
    $region8: #{tpu_custom_call.1} parent=1 // loop_exit
      _
    %1105 = vsyncpa [#allocation3], 1
    %s1106 = scalar_lea.sflag [#allocation3], 1
    %1107 = vsyncpa %s1106, 1
    %1108 = vsyncpa [#allocation6], 1
    %s1109 = scalar_lea.sflag [#allocation6], 1
    %1110 = vsyncpa %s1109, 1
    %1111 = vsyncpa [#allocation9], 1
    %1112 = vsyncpa [#allocation4], 1
    %s1113 = scalar_lea.sflag [#allocation4], 1
    %1114 = vsyncpa %s1113, 1

</llo_original>
